<compile_context>
chip_gen: v7x
topology: tpu7x:2x2x1
jax: 0.10.0
libtpu: 0.0.40
codegen_flags: <defaults>
</compile_context>

<pallas_src>
import functools

import jax
import jax.numpy as jnp
from jax import lax
from jax.experimental import pallas as pl
from jax.experimental.pallas import tpu as pltpu


def _buffer2keyframe_kernel(*refs, N):
    # refs = (buf_0..buf_{N-1}, w_big, conv_bias, add_bias, sel, seg, out, xs)
    buf_refs = refs[:N]
    wbig_ref, bias_ref, abias_ref, sel_ref, seg_ref, o_ref, xs_ref = refs[N:]
    R, HW = xs_ref.shape          # R = N * BB
    BB = sel_ref.shape[0]

    # Assemble X for this image block: row r = n*BB + b  <->  (buffer n, image b).
    for n in range(N):
        xs_ref[pl.ds(n * BB, BB), :] = buf_refs[n][...]
    xf = xs_ref[...]                                               # (R, HW) f32

    # Per-image Gram matrices computed as one (R,R) matmul; the additive bias
    # sends cross-image entries to -1e30 so the row softmax stays block-diagonal.
    g = lax.dot_general(xf, xf, (((1,), (1,)), ((), ())),
                        preferred_element_type=jnp.float32)        # (R, R)
    s = g + abias_ref[...]
    s = s - jnp.max(s, axis=-1, keepdims=True)
    e = jnp.exp(s)                                                 # off-block -> 0
    a = e * pl.reciprocal(jnp.sum(e, axis=-1, keepdims=True), approx=True)

    # Fold the 1x1 conv into the attention:  c[(n,b)] = sum_j w[j] * A[b,j,n]
    c = jnp.dot(wbig_ref[...], a, preferred_element_type=jnp.float32)   # (1, R)
    cm = c * sel_ref[...]                        # (BB, R) per-image selection
    key = jnp.dot(cm, xf, preferred_element_type=jnp.float32)           # (BB, HW)
    key = key + bias_ref[...]                    # conv bias, (1,1) broadcast

    # Softmax over each W-wide segment, kept lane-dense in the flat HW layout.
    # Row-wide max is an exact stabilizer (same math as per-segment max).
    key = key - jnp.max(key, axis=-1, keepdims=True)
    ek = jnp.exp(key)
    seg_sum = jnp.dot(ek, seg_ref[...], preferred_element_type=jnp.float32)   # (BB, H)
    seg_sum = lax.dot_general(seg_sum, seg_ref[...], (((1,), (1,)), ((), ())),
                              preferred_element_type=jnp.float32)             # (BB, HW)
    o_ref[...] = (ek * pl.reciprocal(seg_sum, approx=True)).astype(o_ref.dtype)


def _pick_block_batch(batch):
    # The (8,128) tiling rule constrains the images-per-step block BB (it is the
    # second-to-last dim of the (BB, HW) input/output blocks) to be a multiple
    # of 8 or the full batch.  Keep >= 2 grid steps when possible (v7x megacore).
    if batch >= 16 and batch % 8 == 0:
        for bb in (32, 24, 16, 8):
            if batch % bb == 0 and batch // bb >= 2:
                return bb
        return 8
    return batch


def buffer2keyframe_forward(buffers, conv_weight, conv_bias):
    """buffers: list of (batch, H, W); conv_weight: (1, N, 1, 1); conv_bias: (1,)."""
    N = len(buffers)
    batch, H, W = buffers[0].shape
    HW = H * W
    BB = _pick_block_batch(batch)
    R = N * BB

    # Free reshapes only (contiguous); no stack / transpose of the activations.
    bufs = [b.reshape(batch, HW).astype(jnp.float32) for b in buffers]
    w_vec = conv_weight.reshape(N).astype(jnp.float32)
    w_big = jnp.repeat(w_vec, BB).reshape(1, R)                    # w_big[0, n*BB+b] = w[n]
    bias = conv_bias.reshape(1, 1).astype(jnp.float32)

    img = jnp.arange(R, dtype=jnp.int32) % BB                      # image id of row r
    add_bias = jnp.where(img[:, None] == img[None, :], 0.0, -1e30).astype(jnp.float32)
    sel = jnp.tile(jnp.eye(BB, dtype=jnp.float32), (1, N))         # (BB, R)
    seg = (jnp.arange(HW)[:, None] // W
           == jnp.arange(H)[None, :]).astype(jnp.float32)          # (HW, H)

    kernel = functools.partial(_buffer2keyframe_kernel, N=N)
    out = pl.pallas_call(
        kernel,
        out_shape=jax.ShapeDtypeStruct((batch, HW), jnp.float32),
        grid=(batch // BB,),
        in_specs=[pl.BlockSpec((BB, HW), lambda bi: (bi, 0)) for _ in range(N)] + [
            pl.BlockSpec((1, R), lambda bi: (0, 0)),       # folded conv weights
            pl.BlockSpec((1, 1), lambda bi: (0, 0)),       # conv bias
            pl.BlockSpec((R, R), lambda bi: (0, 0)),       # block-diagonal softmax bias
            pl.BlockSpec((BB, R), lambda bi: (0, 0)),      # per-image selector
            pl.BlockSpec((HW, H), lambda bi: (0, 0)),      # W-segment ones
        ],
        out_specs=pl.BlockSpec((BB, HW), lambda bi: (bi, 0)),
        scratch_shapes=[pltpu.VMEM((R, HW), jnp.float32)],
        compiler_params=pltpu.CompilerParams(dimension_semantics=("parallel",)),
    )(*bufs, w_big, bias, add_bias, sel, seg)

    # Free reshape back to the NCHW conv output layout.
    return out.reshape(batch, 1, H, W)


def _reference(buffers, conv_weight, conv_bias):
    x = jnp.stack(buffers, axis=0).transpose(1, 0, 2, 3)   # (batch, N, H, W)
    batch, N, H, W = x.shape
    xf = x.reshape(batch, N, H * W)
    A = jnp.einsum('bnp,bmp->bnm', xf, xf)
    A = jax.nn.softmax(A, axis=-1)
    Y = jnp.einsum('bjn,bnp->bjp', A, xf).reshape(batch, N, H, W)
    key = jnp.einsum('j,bjhw->bhw', conv_weight.reshape(-1), Y)[:, None, :, :]
    key = key + conv_bias.reshape(-1)[0]
    return jax.nn.softmax(key, axis=-1)


if __name__ == "__main__":
    root = jax.random.PRNGKey(0)
    buffer_size, H, W = 4, 16, 16

    for batch in (2, 16):   # batch=2: single-step grid; batch=16: BB=8, 2 pipelined steps
        k_buf, k_w = jax.random.split(jax.random.fold_in(root, batch))
        buffers = [
            jax.random.normal(jax.random.fold_in(k_buf, i), (batch, H, W), jnp.float32)
            for i in range(buffer_size)
        ]
        # Conv2d(buffer_size, 1, 1) init per fill_weights: kaiming_normal_
        # (fan_out=1) -> std=sqrt(2); bias = 0.
        conv_weight = jnp.sqrt(2.0) * jax.random.normal(
            k_w, (1, buffer_size, 1, 1), jnp.float32)
        conv_bias = jnp.zeros((1,), jnp.float32)

        out = jax.block_until_ready(
            buffer2keyframe_forward(buffers, conv_weight, conv_bias))
        ref = _reference(buffers, conv_weight, conv_bias)
        assert out.shape == (batch, 1, H, W), out.shape
        # 2e-3 tolerance: approx (EUP) reciprocals in the softmax normalizations.
        assert jnp.allclose(out, ref, atol=2e-3, rtol=2e-3), \
            f"mismatch vs pure-JAX reference (batch={batch})"

    print("KERNEL_OK")
</pallas_src>

<mosaic_0001>
module attributes {stable_mosaic.version = 11 : i64} {
  func.func @_buffer2keyframe_kernel(%arg0: i32, %arg1: memref<2x256xf32, #tpu.memory_space<vmem>>, %arg2: memref<2x256xf32, #tpu.memory_space<vmem>>, %arg3: memref<2x256xf32, #tpu.memory_space<vmem>>, %arg4: memref<2x256xf32, #tpu.memory_space<vmem>>, %arg5: memref<1x8xf32, #tpu.memory_space<vmem>>, %arg6: memref<1x1xf32, #tpu.memory_space<vmem>>, %arg7: memref<8x8xf32, #tpu.memory_space<vmem>>, %arg8: memref<2x8xf32, #tpu.memory_space<vmem>>, %arg9: memref<256x16xf32, #tpu.memory_space<vmem>>, %arg10: memref<2x256xf32, #tpu.memory_space<vmem>>, %arg11: memref<8x256xf32, #tpu.memory_space<vmem>>) attributes {dimension_semantics = [#tpu.dimension_semantics<parallel>], iteration_bounds = array<i64: 1>, scalar_prefetch = 0 : i64, scratch_operands = 1 : i64, tpu.core_type = #tpu.core_type<tc>, window_params = [{transform_indices = @transform_0, window_bounds = array<i64: 2, 256>}, {transform_indices = @transform_1, window_bounds = array<i64: 2, 256>}, {transform_indices = @transform_2, window_bounds = array<i64: 2, 256>}, {transform_indices = @transform_3, window_bounds = array<i64: 2, 256>}, {pipeline_mode = #tpu.pipeline_mode<synchronous>, transform_indices = @transform_4, window_bounds = array<i64: 1, 8>}, {pipeline_mode = #tpu.pipeline_mode<synchronous>, transform_indices = @transform_5, window_bounds = array<i64: 1, 1>}, {pipeline_mode = #tpu.pipeline_mode<synchronous>, transform_indices = @transform_6, window_bounds = array<i64: 8, 8>}, {pipeline_mode = #tpu.pipeline_mode<synchronous>, transform_indices = @transform_7, window_bounds = array<i64: 2, 8>}, {pipeline_mode = #tpu.pipeline_mode<synchronous>, transform_indices = @transform_8, window_bounds = array<i64: 256, 16>}, {transform_indices = @transform_9, window_bounds = array<i64: 2, 256>}]} {
    %c0 = arith.constant 0 : index
    %c0_0 = arith.constant 0 : index
    %0 = vector.load %arg1[%c0, %c0_0] : memref<2x256xf32, #tpu.memory_space<vmem>>, vector<2x256xf32>
    %c0_1 = arith.constant 0 : index
    %c0_2 = arith.constant 0 : index
    %1 = vector.load %arg11[%c0_1, %c0_2] : memref<8x256xf32, #tpu.memory_space<vmem>>, vector<2x256xf32>
    tpu.vector_store %arg11[%c0_1, %c0_2], %0 {strides = array<i32>} : memref<8x256xf32, #tpu.memory_space<vmem>>, vector<2x256xf32>,
    %c0_3 = arith.constant 0 : index
    %c0_4 = arith.constant 0 : index
    %2 = vector.load %arg2[%c0_3, %c0_4] : memref<2x256xf32, #tpu.memory_space<vmem>>, vector<2x256xf32>
    %c2 = arith.constant 2 : index
    %c0_5 = arith.constant 0 : index
    %3 = vector.load %arg11[%c2, %c0_5] : memref<8x256xf32, #tpu.memory_space<vmem>>, vector<2x256xf32>
    tpu.vector_store %arg11[%c2, %c0_5], %2 {strides = array<i32>} : memref<8x256xf32, #tpu.memory_space<vmem>>, vector<2x256xf32>,
    %c0_6 = arith.constant 0 : index
    %c0_7 = arith.constant 0 : index
    %4 = vector.load %arg3[%c0_6, %c0_7] : memref<2x256xf32, #tpu.memory_space<vmem>>, vector<2x256xf32>
    %c4 = arith.constant 4 : index
    %c0_8 = arith.constant 0 : index
    %5 = vector.load %arg11[%c4, %c0_8] : memref<8x256xf32, #tpu.memory_space<vmem>>, vector<2x256xf32>
    tpu.vector_store %arg11[%c4, %c0_8], %4 {strides = array<i32>} : memref<8x256xf32, #tpu.memory_space<vmem>>, vector<2x256xf32>,
    %c0_9 = arith.constant 0 : index
    %c0_10 = arith.constant 0 : index
    %6 = vector.load %arg4[%c0_9, %c0_10] : memref<2x256xf32, #tpu.memory_space<vmem>>, vector<2x256xf32>
    %c6 = arith.constant 6 : index
    %c0_11 = arith.constant 0 : index
    %7 = vector.load %arg11[%c6, %c0_11] : memref<8x256xf32, #tpu.memory_space<vmem>>, vector<2x256xf32>
    tpu.vector_store %arg11[%c6, %c0_11], %6 {strides = array<i32>} : memref<8x256xf32, #tpu.memory_space<vmem>>, vector<2x256xf32>,
    %c0_12 = arith.constant 0 : index
    %c0_13 = arith.constant 0 : index
    %8 = vector.load %arg11[%c0_12, %c0_13] : memref<8x256xf32, #tpu.memory_space<vmem>>, vector<8x256xf32>
    %cst = arith.constant dense<0.000000e+00> : vector<8x8xf32>
    %9 = tpu.matmul %8, %8, %cst {dimension_numbers = #tpu.dot_dimension_numbers<[1], [1], [0], [0], [0, 0, 1, 0], [], []>} : vector<8x256xf32>, vector<8x256xf32>, vector<8x8xf32> -> vector<8x8xf32>
    %c0_14 = arith.constant 0 : index
    %c0_15 = arith.constant 0 : index
    %10 = vector.load %arg7[%c0_14, %c0_15] : memref<8x8xf32, #tpu.memory_space<vmem>>, vector<8x8xf32>
    %11 = arith.addf %9, %10 : vector<8x8xf32>
    %cst_16 = arith.constant dense<0xFF800000> : vector<8xf32>
    %12 = vector.multi_reduction <maximumf>, %11, %cst_16 [1] : vector<8x8xf32> to vector<8xf32>
    %13 = vector.shape_cast %12 : vector<8xf32> to vector<8x1xf32>
    %14 = vector.broadcast %13 : vector<8x1xf32> to vector<8x8xf32>
    %15 = arith.subf %11, %14 : vector<8x8xf32>
    %16 = math.exp %15 : vector<8x8xf32>
    %cst_17 = arith.constant dense<0.000000e+00> : vector<8xf32>
    %17 = vector.multi_reduction <add>, %16, %cst_17 [1] : vector<8x8xf32> to vector<8xf32>
    %18 = vector.shape_cast %17 : vector<8xf32> to vector<8x1xf32>
    %19 = tpu.reciprocal %18 {approx = true} : vector<8x1xf32> -> vector<8x1xf32>
    %20 = vector.broadcast %19 : vector<8x1xf32> to vector<8x8xf32>
    %21 = arith.mulf %16, %20 : vector<8x8xf32>
    %c0_18 = arith.constant 0 : index
    %c0_19 = arith.constant 0 : index
    %22 = vector.load %arg5[%c0_18, %c0_19] : memref<1x8xf32, #tpu.memory_space<vmem>>, vector<1x8xf32>
    %cst_20 = arith.constant dense<0.000000e+00> : vector<1x8xf32>
    %23 = tpu.matmul %22, %21, %cst_20 {dimension_numbers = #tpu.dot_dimension_numbers<[1], [0], [0], [1], [0, 0, 1, 1], [], []>} : vector<1x8xf32>, vector<8x8xf32>, vector<1x8xf32> -> vector<1x8xf32>
    %c0_21 = arith.constant 0 : index
    %c0_22 = arith.constant 0 : index
    %24 = vector.load %arg8[%c0_21, %c0_22] : memref<2x8xf32, #tpu.memory_space<vmem>>, vector<2x8xf32>
    %25 = vector.broadcast %23 : vector<1x8xf32> to vector<2x8xf32>
    %26 = arith.mulf %25, %24 : vector<2x8xf32>
    %cst_23 = arith.constant dense<0.000000e+00> : vector<2x256xf32>
    %27 = tpu.matmul %26, %8, %cst_23 {dimension_numbers = #tpu.dot_dimension_numbers<[1], [0], [0], [1], [0, 0, 1, 1], [], []>} : vector<2x8xf32>, vector<8x256xf32>, vector<2x256xf32> -> vector<2x256xf32>
    %c0_24 = arith.constant 0 : index
    %c0_25 = arith.constant 0 : index
    %28 = vector.load %arg6[%c0_24, %c0_25] : memref<1x1xf32, #tpu.memory_space<vmem>>, vector<1x1xf32>
    %29 = vector.broadcast %28 : vector<1x1xf32> to vector<2x256xf32>
    %30 = arith.addf %27, %29 : vector<2x256xf32>
    %cst_26 = arith.constant dense<0xFF800000> : vector<2xf32>
    %31 = vector.multi_reduction <maximumf>, %30, %cst_26 [1] : vector<2x256xf32> to vector<2xf32>
    %32 = vector.shape_cast %31 : vector<2xf32> to vector<2x1xf32>
    %33 = vector.broadcast %32 : vector<2x1xf32> to vector<2x256xf32>
    %34 = arith.subf %30, %33 : vector<2x256xf32>
    %35 = math.exp %34 : vector<2x256xf32>
    %c0_27 = arith.constant 0 : index
    %c0_28 = arith.constant 0 : index
    %36 = vector.load %arg9[%c0_27, %c0_28] : memref<256x16xf32, #tpu.memory_space<vmem>>, vector<256x16xf32>
    %cst_29 = arith.constant dense<0.000000e+00> : vector<2x16xf32>
    %37 = tpu.matmul %35, %36, %cst_29 {dimension_numbers = #tpu.dot_dimension_numbers<[1], [0], [0], [1], [0, 0, 1, 1], [], []>} : vector<2x256xf32>, vector<256x16xf32>, vector<2x16xf32> -> vector<2x16xf32>
    %c0_30 = arith.constant 0 : index
    %c0_31 = arith.constant 0 : index
    %38 = vector.load %arg9[%c0_30, %c0_31] : memref<256x16xf32, #tpu.memory_space<vmem>>, vector<256x16xf32>
    %cst_32 = arith.constant dense<0.000000e+00> : vector<2x256xf32>
    %39 = tpu.matmul %37, %38, %cst_32 {dimension_numbers = #tpu.dot_dimension_numbers<[1], [1], [0], [0], [0, 0, 1, 0], [], []>} : vector<2x16xf32>, vector<256x16xf32>, vector<2x256xf32> -> vector<2x256xf32>
    %40 = tpu.reciprocal %39 {approx = true} : vector<2x256xf32> -> vector<2x256xf32>
    %41 = arith.mulf %35, %40 : vector<2x256xf32>
    %c0_33 = arith.constant 0 : index
    %c0_34 = arith.constant 0 : index
    %42 = vector.load %arg10[%c0_33, %c0_34] : memref<2x256xf32, #tpu.memory_space<vmem>>, vector<2x256xf32>
    tpu.vector_store %arg10[%c0_33, %c0_34], %41 {strides = array<i32>} : memref<2x256xf32, #tpu.memory_space<vmem>>, vector<2x256xf32>,
    return
  }
  func.func @transform_0(%arg0: i32) -> (i32, i32) {
    %c0_i32 = arith.constant 0 : i32
    %c0_i32_0 = arith.constant 0 : i32
    return %arg0, %c0_i32 : i32, i32
  }
  func.func @transform_1(%arg0: i32) -> (i32, i32) {
    %c0_i32 = arith.constant 0 : i32
    %c0_i32_0 = arith.constant 0 : i32
    return %arg0, %c0_i32 : i32, i32
  }
  func.func @transform_2(%arg0: i32) -> (i32, i32) {
    %c0_i32 = arith.constant 0 : i32
    %c0_i32_0 = arith.constant 0 : i32
    return %arg0, %c0_i32 : i32, i32
  }
  func.func @transform_3(%arg0: i32) -> (i32, i32) {
    %c0_i32 = arith.constant 0 : i32
    %c0_i32_0 = arith.constant 0 : i32
    return %arg0, %c0_i32 : i32, i32
  }
  func.func @transform_4(%arg0: i32) -> (i32, i32) {
    %c0_i32 = arith.constant 0 : i32
    %c0_i32_0 = arith.constant 0 : i32
    %c0_i32_1 = arith.constant 0 : i32
    return %c0_i32, %c0_i32_0 : i32, i32
  }
  func.func @transform_5(%arg0: i32) -> (i32, i32) {
    %c0_i32 = arith.constant 0 : i32
    %c0_i32_0 = arith.constant 0 : i32
    %c0_i32_1 = arith.constant 0 : i32
    return %c0_i32, %c0_i32_0 : i32, i32
  }
  func.func @transform_6(%arg0: i32) -> (i32, i32) {
    %c0_i32 = arith.constant 0 : i32
    %c0_i32_0 = arith.constant 0 : i32
    %c0_i32_1 = arith.constant 0 : i32
    return %c0_i32, %c0_i32_0 : i32, i32
  }
  func.func @transform_7(%arg0: i32) -> (i32, i32) {
    %c0_i32 = arith.constant 0 : i32
    %c0_i32_0 = arith.constant 0 : i32
    %c0_i32_1 = arith.constant 0 : i32
    return %c0_i32, %c0_i32_0 : i32, i32
  }
  func.func @transform_8(%arg0: i32) -> (i32, i32) {
    %c0_i32 = arith.constant 0 : i32
    %c0_i32_0 = arith.constant 0 : i32
    %c0_i32_1 = arith.constant 0 : i32
    return %c0_i32, %c0_i32_0 : i32, i32
  }
  func.func @transform_9(%arg0: i32) -> (i32, i32) {
    %c0_i32 = arith.constant 0 : i32
    %c0_i32_0 = arith.constant 0 : i32
    return %arg0, %c0_i32 : i32, i32
  }
}

</mosaic_0001>

<llo_original>
// kernel: tpu_custom_call.1
$region0: #{tpu_custom_call.1}
  #allocation0 [shape = 'u32[]', space=smem, size = 0x4, offset = 0x4, fixed_abs, tag = 'smem constant byte address 0x4 - core index']
  #allocation1 [shape = 'u32[144,128]{1,0:T(1,128)}', space=vmem, size = 0x12000, scoped, tag = 'internal scratch']
  #allocation2 [shape = 'f32[8,256]{1,0:T(8,128)}', space=vmem, size = 0x2000, scoped, tag = 'scratch operand']
  #allocation3 [shape = 'f32[1,1]{1,0:T(1,128)S(1)}', space=vmem, size = 0x200, scoped, tag = 'scoped memory for tpu_custom_call.1']
  %s0 = inlined_call_operand.vmem [shape: f32[2,256], index: 0, kind: input, shape index: {}]
  %s1 = inlined_call_operand.vmem [shape: f32[2,256], index: 1, kind: input, shape index: {}]
  %s2 = inlined_call_operand.vmem [shape: f32[2,256], index: 2, kind: input, shape index: {}]
  %s3 = inlined_call_operand.vmem [shape: f32[2,256], index: 3, kind: input, shape index: {}]
  %s4 = inlined_call_operand.vmem [shape: f32[1,8], index: 4, kind: input, shape index: {}]
  %s5 = inlined_call_operand.<no memory space> [shape: f32[1,1], index: 5, kind: input, shape index: {}]
  %s6 = inlined_call_operand.vmem [shape: f32[8,8], index: 6, kind: input, shape index: {}]
  %s7 = inlined_call_operand.vmem [shape: f32[2,8], index: 7, kind: input, shape index: {}]
  %s8 = inlined_call_operand.vmem [shape: f32[256,16], index: 8, kind: input, shape index: {}]
  %s9 = inlined_call_operand.hbm [shape: f32[2,256], index: 9, kind: output, shape index: {}]
  %s10 = sld [smem:[#allocation0]]
  $region46: #{tpu_custom_call.1} parent=0
    _
  %s12 = ssub.s32 1, %s10
  %s13 = scalar_select 0, %s12, %s10
  %v14 = vstv %s5
  %15 = vst [vmem:[#allocation3] sm:$0x1] %v14
  $region1: #{tpu_custom_call.1} parent=0
    #allocation4 [shape = 'u8[2048]{0}', space=vmem, size = 0x800, scoped, tag = 'output window, operand 0, single buffered']
    #allocation5 [shape = 's32[1]{0}', space=sflag, size = 0x4, scoped, tag = 'scoped memory for tpu_custom_call.1']
    %16 = vsyncpa [#allocation5], 0
    // Predicated region
    $region2: #{tpu_custom_call.1} parent=1 // pred_check
      _
    $region3: #{tpu_custom_call.1} parent=1 // pred_check_branch
      %18 = sbr.rel (0) target = $region5
    $region4: #{tpu_custom_call.1} parent=1 // pred_region
      _
    $region5: #{tpu_custom_call.1} parent=1 // pred_fallthru
      _
    // Predicated region
    $region6: #{tpu_custom_call.1} parent=1 // pred_check
      _
    $region7: #{tpu_custom_call.1} parent=1 // pred_check_branch
      %20 = sbr.rel (0) target = $region9
    $region8: #{tpu_custom_call.1} parent=1 // pred_region
      _
    $region9: #{tpu_custom_call.1} parent=1 // pred_fallthru
      _
    // Predicated region
    $region10: #{tpu_custom_call.1} parent=1 // pred_check
      _
    $region11: #{tpu_custom_call.1} parent=1 // pred_check_branch
      %22 = sbr.rel (0) target = $region13
    $region12: #{tpu_custom_call.1} parent=1 // pred_region
      _
    $region13: #{tpu_custom_call.1} parent=1 // pred_fallthru
      _
    // Predicated region
    $region14: #{tpu_custom_call.1} parent=1 // pred_check
      _
    $region15: #{tpu_custom_call.1} parent=1 // pred_check_branch
      %24 = sbr.rel (0) target = $region17
    $region16: #{tpu_custom_call.1} parent=1 // pred_region
      _
    $region17: #{tpu_custom_call.1} parent=1 // pred_fallthru
      _
    // Predicated region
    $region18: #{tpu_custom_call.1} parent=1 // pred_check
      _
    $region19: #{tpu_custom_call.1} parent=1 // pred_check_branch
      %26 = sbr.rel (0) target = $region21
    $region20: #{tpu_custom_call.1} parent=1 // pred_region
      _
    $region21: #{tpu_custom_call.1} parent=1 // pred_fallthru
      _
    // Predicated region
    $region22: #{tpu_custom_call.1} parent=1 // pred_check
      _
    $region23: #{tpu_custom_call.1} parent=1 // pred_check_branch
      %28 = sbr.rel (0) target = $region25
    $region24: #{tpu_custom_call.1} parent=1 // pred_region
      _
    $region25: #{tpu_custom_call.1} parent=1 // pred_fallthru
      _
    // Predicated region
    $region26: #{tpu_custom_call.1} parent=1 // pred_check
      _
    $region27: #{tpu_custom_call.1} parent=1 // pred_check_branch
      %30 = sbr.rel (0) target = $region29
    $region28: #{tpu_custom_call.1} parent=1 // pred_region
      _
    $region29: #{tpu_custom_call.1} parent=1 // pred_fallthru
      _
    // Predicated region
    $region30: #{tpu_custom_call.1} parent=1 // pred_check
      _
    $region31: #{tpu_custom_call.1} parent=1 // pred_check_branch
      %32 = sbr.rel (0) target = $region33
    $region32: #{tpu_custom_call.1} parent=1 // pred_region
      _
    $region33: #{tpu_custom_call.1} parent=1 // pred_fallthru
      _
    // Predicated region
    $region34: #{tpu_custom_call.1} parent=1 // pred_check
      _
    $region35: #{tpu_custom_call.1} parent=1 // pred_check_branch
      %34 = sbr.rel (0) target = $region37
    $region36: #{tpu_custom_call.1} parent=1 // pred_region
      _
    $region37: #{tpu_custom_call.1} parent=1 // pred_fallthru
      _
    %v35 = vld [vmem:[%s0] sm:$0xf]
    %v38 = vunpack.c.l.s4 1983009808
    %v39 = vunpack.c.0.s8 %v38
    %v40 = vlaneseq
    %v41 = vshrl.u32 %v40, 7
    %v42 = vsub.s32 %v39, %v41
    %v43 = vrot.slane %v35, %v42
    %v44 = vcombine.high %v43, %v43
    %47 = vst [vmem:[#allocation2] sm:$0x3] %v43
    %48 = vst [vmem:[#allocation2 + $0x8] sm:$0x3] %v44
    %v49 = vld [vmem:[%s1] sm:$0xf]
    %v51 = vcombine.low %v49, %v49
    %v53 = vunpack.c.l.s4 1983009808
    %v54 = vunpack.c.0.s8 %v53
    %v55 = vlaneseq
    %v56 = vshrl.u32 %v55, 7
    %v57 = vsub.s32 %v54, %v56
    %v58 = vrot.slane %v51, %v57
    %v59 = vcombine.high %v58, %v58
    %62 = vst [vmem:[#allocation2] sm:$0xc] %v58
    %63 = vst [vmem:[#allocation2 + $0x8] sm:$0xc] %v59
    %v64 = vld [vmem:[%s2] sm:$0xf]
    %v67 = vunpack.c.l.s4 1983009808
    %v68 = vunpack.c.0.s8 %v67
    %v69 = vlaneseq
    %v70 = vshrl.u32 %v69, 7
    %v71 = vsub.s32 %v68, %v70
    %v72 = vrot.slane %v64, %v71
    %v73 = vcombine.low %v72, %v72
    %76 = vst [vmem:[#allocation2] sm:$0x30] %v73
    %77 = vst [vmem:[#allocation2 + $0x8] sm:$0x30] %v72
    %v78 = vld [vmem:[%s3] sm:$0xf]
    %v80 = vcombine.low %v78, %v78
    %v82 = vunpack.c.l.s4 1983009808
    %v83 = vunpack.c.0.s8 %v82
    %v84 = vlaneseq
    %v85 = vshrl.u32 %v84, 7
    %v86 = vsub.s32 %v83, %v85
    %v87 = vrot.slane %v80, %v86
    %v88 = vcombine.low %v87, %v87
    %91 = vst [vmem:[#allocation2] sm:$0xc0] %v88
    %92 = vst [vmem:[#allocation2 + $0x8] sm:$0xc0] %v87
    %v93 = vld [vmem:[#allocation2] sm:$0xff]
    %v94 = vld [vmem:[#allocation2 + $0x8] sm:$0xff]
    %v95 = vld [vmem:[%s6] sm:$0xff]
    %96 = vmatprep.subr.mxu0 %v94
    %97 = vmatpush1.xpose.msra.mxu0 %v93
    %98 = vmatprep.subr.mxu0 0.0
    %99 = vmatpush1.xpose.msra.mxu0 0.0
    %100 = vmatprep.subr.mxu0 0.0
    %101 = vmatpush1.xpose.msra.mxu0 0.0
    %102 = vmatprep.subr.mxu0 0.0
    %103 = vmatpush1.xpose.msra.mxu0 0.0
    %104 = vmatprep.subr.mxu0 0.0
    %105 = vmatpush1.xpose.msra.mxu0 0.0
    %106 = vmatprep.subr.mxu0 0.0
    %107 = vmatpush1.xpose.msra.mxu0 0.0
    %108 = vmatprep.subr.mxu0 0.0
    %109 = vmatpush1.xpose.msra.mxu0 0.0
    %110 = vmatprep.subr.mxu0 0.0
    %111 = vmatpush1.xpose.msra.mxu0 0.0
    %112 = vmatprep.subr.mxu0 0.0
    %113 = vmatpush1.xpose.msra.mxu0 0.0
    %114 = vmatprep.subr.mxu0 0.0
    %115 = vmatpush1.xpose.msra.mxu0 0.0
    %116 = vmatprep.subr.mxu0 0.0
    %117 = vmatpush1.xpose.msra.mxu0 0.0
    %118 = vmatprep.subr.mxu0 0.0
    %119 = vmatpush1.xpose.msra.mxu0 0.0
    %120 = vmatprep.subr.mxu0 0.0
    %121 = vmatpush1.xpose.msra.mxu0 0.0
    %122 = vmatprep.subr.mxu0 0.0
    %123 = vmatpush1.xpose.msra.mxu0 0.0
    %124 = vmatprep.subr.mxu0 0.0
    %125 = vmatpush1.xpose.msra.mxu0 0.0
    %126 = vmatprep.subr.mxu0 0.0
    %127 = vmatpush1.xpose.msra.mxu0 0.0
    %128 = vmatprep.subr.mxu0 0.0
    %129 = vmatpush1.xpose.msra.mxu0 0.0
    %130 = vmatprep.subr.mxu0 0.0
    %131 = vmatpush1.xpose.msra.mxu0 0.0
    %132 = vmatprep.subr.mxu0 0.0
    %133 = vmatpush1.xpose.msra.mxu0 0.0
    %134 = vmatprep.subr.mxu0 0.0
    %135 = vmatpush1.xpose.msra.mxu0 0.0
    %136 = vmatprep.subr.mxu0 0.0
    %137 = vmatpush1.xpose.msra.mxu0 0.0
    %138 = vmatprep.subr.mxu0 0.0
    %139 = vmatpush1.xpose.msra.mxu0 0.0
    %140 = vmatprep.subr.mxu0 0.0
    %141 = vmatpush1.xpose.msra.mxu0 0.0
    %142 = vmatprep.subr.mxu0 0.0
    %143 = vmatpush1.xpose.msra.mxu0 0.0
    %144 = vmatprep.subr.mxu0 0.0
    %145 = vmatpush1.xpose.msra.mxu0 0.0
    %146 = vmatprep.subr.mxu0 0.0
    %147 = vmatpush1.xpose.msra.mxu0 0.0
    %148 = vmatprep.subr.mxu0 0.0
    %149 = vmatpush1.xpose.msra.mxu0 0.0
    %150 = vmatprep.subr.mxu0 0.0
    %151 = vmatpush1.xpose.msra.mxu0 0.0
    %152 = vmatprep.subr.mxu0 0.0
    %153 = vmatpush1.xpose.msra.mxu0 0.0
    %154 = vmatprep.subr.mxu0 0.0
    %155 = vmatpush1.xpose.msra.mxu0 0.0
    %156 = vmatprep.subr.mxu0 0.0
    %157 = vmatpush1.xpose.msra.mxu0 0.0
    %158 = vmatprep.subr.mxu0 0.0
    %159 = vmatpush1.xpose.msra.mxu0 0.0
    %160 = vmatprep.mubr.f32.mxu0 %v94
    %161 = vmatmul.mubr.f32.gmra.mrb[0].mxu0 %v93
    %v162 = vpop.f32.mrb[0].mxu0
    %v163 = vadd.f32 %v95, %v162
    %v164 = vpop.f32.mrb[0].mxu0
    %165 = vdwg.mxu0
    %vm166 = vcmask 64512
    %v167 = vsel %vm166, %v163, -inf
    %168 = vmax.xlane.f32.xlu0 %v167
    %v169 = vpop.xlane.xlu0 %168
    %v170 = vsub.f32 %v163, %v169
    %v171 = vmul.f32 %v170, 1.442695
    %v172 = vpow.pop %v171
    %v173 = vsel %vm166, %v172, 0.0
    %174 = vadd.xlane.f32.xlu0 %v173
    %v175 = vpop.xlane.xlu0 %174
    %v176 = vrcp.pop %v175
    %v177 = vmul.f32 %v172, %v176
    %v178 = vld [vmem:[%s4] sm:$0x1]
    %v180 = vsel %vm166, %v178, 0
    %182 = vmatprep.subr.mxu0 0.0
    %183 = vmatpush1.msra.mxu0 %v177
    %184 = vmatprep.subr.mxu0 0.0
    %185 = vmatpush1.msra.mxu0 0.0
    %186 = vmatprep.subr.mxu0 0.0
    %187 = vmatpush1.msra.mxu0 0.0
    %188 = vmatprep.subr.mxu0 0.0
    %189 = vmatpush1.msra.mxu0 0.0
    %190 = vmatprep.subr.mxu0 0.0
    %191 = vmatpush1.msra.mxu0 0.0
    %192 = vmatprep.subr.mxu0 0.0
    %193 = vmatpush1.msra.mxu0 0.0
    %194 = vmatprep.subr.mxu0 0.0
    %195 = vmatpush1.msra.mxu0 0.0
    %196 = vmatprep.subr.mxu0 0.0
    %197 = vmatpush1.msra.mxu0 0.0
    %198 = vmatprep.subr.mxu0 0.0
    %199 = vmatpush1.msra.mxu0 0.0
    %200 = vmatprep.subr.mxu0 0.0
    %201 = vmatpush1.msra.mxu0 0.0
    %202 = vmatprep.subr.mxu0 0.0
    %203 = vmatpush1.msra.mxu0 0.0
    %204 = vmatprep.subr.mxu0 0.0
    %205 = vmatpush1.msra.mxu0 0.0
    %206 = vmatprep.subr.mxu0 0.0
    %207 = vmatpush1.msra.mxu0 0.0
    %208 = vmatprep.subr.mxu0 0.0
    %209 = vmatpush1.msra.mxu0 0.0
    %210 = vmatprep.subr.mxu0 0.0
    %211 = vmatpush1.msra.mxu0 0.0
    %212 = vmatprep.subr.mxu0 0.0
    %213 = vmatpush1.msra.mxu0 0.0
    %214 = vmatprep.subr.mxu0 0.0
    %215 = vmatpush1.msra.mxu0 0.0
    %216 = vmatprep.subr.mxu0 0.0
    %217 = vmatpush1.msra.mxu0 0.0
    %218 = vmatprep.subr.mxu0 0.0
    %219 = vmatpush1.msra.mxu0 0.0
    %220 = vmatprep.subr.mxu0 0.0
    %221 = vmatpush1.msra.mxu0 0.0
    %222 = vmatprep.subr.mxu0 0.0
    %223 = vmatpush1.msra.mxu0 0.0
    %224 = vmatprep.subr.mxu0 0.0
    %225 = vmatpush1.msra.mxu0 0.0
    %226 = vmatprep.subr.mxu0 0.0
    %227 = vmatpush1.msra.mxu0 0.0
    %228 = vmatprep.subr.mxu0 0.0
    %229 = vmatpush1.msra.mxu0 0.0
    %230 = vmatprep.subr.mxu0 0.0
    %231 = vmatpush1.msra.mxu0 0.0
    %232 = vmatprep.subr.mxu0 0.0
    %233 = vmatpush1.msra.mxu0 0.0
    %234 = vmatprep.subr.mxu0 0.0
    %235 = vmatpush1.msra.mxu0 0.0
    %236 = vmatprep.subr.mxu0 0.0
    %237 = vmatpush1.msra.mxu0 0.0
    %238 = vmatprep.subr.mxu0 0.0
    %239 = vmatpush1.msra.mxu0 0.0
    %240 = vmatprep.subr.mxu0 0.0
    %241 = vmatpush1.msra.mxu0 0.0
    %242 = vmatprep.subr.mxu0 0.0
    %243 = vmatpush1.msra.mxu0 0.0
    %244 = vmatprep.subr.mxu0 0.0
    %245 = vmatpush1.msra.mxu0 0.0
    %246 = vmatprep.mubr.f32.mxu0 0.0
    %247 = vmatmul.mubr.f32.gmra.mrb[0].mxu0 %v180
    %v248 = vpop.f32.mrb[0].mxu0
    %v249 = vadd.f32 0.0, %v248
    %v250 = vpop.f32.mrb[0].mxu0
    %251 = vdwg.mxu0
    %v252 = vld [vmem:[%s7] sm:$0x3]
    %v253 = vlaneseq
    %v254 = vshrl.u32 %v253, 7
    %v255 = vsub.s32 0, %v254
    %v256 = vrot.slane %v249, %v255
    %v257 = vmul.f32 %v256, %v252
    %v258 = vld [vmem:[#allocation3] sm:$0x1]
    %v260 = vlaneseq
    %v261 = vshrl.u32 %v260, 7
    %v262 = vsub.s32 0, %v261
    %v263 = vrot.slane %v258, %v262
    %264 = vset.pattern.permute.xlu0 0
    %265 = vperm.xlu0 %264, %v263
    %v266 = vpop.permute.xlu0 %265
    %v269 = vsel %vm166, %v257, 0
    %271 = vmatprep.subr.mxu0 %v94
    %272 = vmatpush1.msra.mxu0 %v93
    %273 = vmatprep.subr.mxu0 0.0
    %274 = vmatpush1.msra.mxu0 0.0
    %275 = vmatprep.subr.mxu0 0.0
    %276 = vmatpush1.msra.mxu0 0.0
    %277 = vmatprep.subr.mxu0 0.0
    %278 = vmatpush1.msra.mxu0 0.0
    %279 = vmatprep.subr.mxu0 0.0
    %280 = vmatpush1.msra.mxu0 0.0
    %281 = vmatprep.subr.mxu0 0.0
    %282 = vmatpush1.msra.mxu0 0.0
    %283 = vmatprep.subr.mxu0 0.0
    %284 = vmatpush1.msra.mxu0 0.0
    %285 = vmatprep.subr.mxu0 0.0
    %286 = vmatpush1.msra.mxu0 0.0
    %287 = vmatprep.subr.mxu0 0.0
    %288 = vmatpush1.msra.mxu0 0.0
    %289 = vmatprep.subr.mxu0 0.0
    %290 = vmatpush1.msra.mxu0 0.0
    %291 = vmatprep.subr.mxu0 0.0
    %292 = vmatpush1.msra.mxu0 0.0
    %293 = vmatprep.subr.mxu0 0.0
    %294 = vmatpush1.msra.mxu0 0.0
    %295 = vmatprep.subr.mxu0 0.0
    %296 = vmatpush1.msra.mxu0 0.0
    %297 = vmatprep.subr.mxu0 0.0
    %298 = vmatpush1.msra.mxu0 0.0
    %299 = vmatprep.subr.mxu0 0.0
    %300 = vmatpush1.msra.mxu0 0.0
    %301 = vmatprep.subr.mxu0 0.0
    %302 = vmatpush1.msra.mxu0 0.0
    %303 = vmatprep.subr.mxu0 0.0
    %304 = vmatpush1.msra.mxu0 0.0
    %305 = vmatprep.subr.mxu0 0.0
    %306 = vmatpush1.msra.mxu0 0.0
    %307 = vmatprep.subr.mxu0 0.0
    %308 = vmatpush1.msra.mxu0 0.0
    %309 = vmatprep.subr.mxu0 0.0
    %310 = vmatpush1.msra.mxu0 0.0
    %311 = vmatprep.subr.mxu0 0.0
    %312 = vmatpush1.msra.mxu0 0.0
    %313 = vmatprep.subr.mxu0 0.0
    %314 = vmatpush1.msra.mxu0 0.0
    %315 = vmatprep.subr.mxu0 0.0
    %316 = vmatpush1.msra.mxu0 0.0
    %317 = vmatprep.subr.mxu0 0.0
    %318 = vmatpush1.msra.mxu0 0.0
    %319 = vmatprep.subr.mxu0 0.0
    %320 = vmatpush1.msra.mxu0 0.0
    %321 = vmatprep.subr.mxu0 0.0
    %322 = vmatpush1.msra.mxu0 0.0
    %323 = vmatprep.subr.mxu0 0.0
    %324 = vmatpush1.msra.mxu0 0.0
    %325 = vmatprep.subr.mxu0 0.0
    %326 = vmatpush1.msra.mxu0 0.0
    %327 = vmatprep.subr.mxu0 0.0
    %328 = vmatpush1.msra.mxu0 0.0
    %329 = vmatprep.subr.mxu0 0.0
    %330 = vmatpush1.msra.mxu0 0.0
    %331 = vmatprep.subr.mxu0 0.0
    %332 = vmatpush1.msra.mxu0 0.0
    %333 = vmatprep.subr.mxu0 0.0
    %334 = vmatpush1.msra.mxu0 0.0
    %335 = vmatprep.mubr.f32.mxu0 0.0
    %336 = vmatmul.mubr.f32.gmra.mrb[0].mxu0 %v269
    %v337 = vpop.f32.mrb[0].mxu0
    %v338 = vadd.f32 %v266, %v337
    %v339 = vpop.f32.mrb[0].mxu0
    %v340 = vadd.f32 %v266, %v339
    %341 = vdwg.mxu0
    %vm342 = vcmask 1041408
    %v343 = vsel %vm342, %v338, -inf
    %v344 = vsel %vm342, %v340, -inf
    %v345 = vmax.f32 %v343, %v344
    %346 = vmax.xlane.f32.xlu0 %v345
    %v347 = vpop.xlane.xlu0 %346
    %v348 = vsub.f32 %v338, %v347
    %v349 = vsub.f32 %v340, %v347
    %v350 = vmul.f32 %v348, 1.442695
    %v351 = vpow.pop %v350
    %v352 = vmul.f32 %v349, 1.442695
    %v353 = vpow.pop %v352
    %v354 = vld [vmem:[%s8] sm:$0xff]
    %v355 = vld [vmem:[%s8 + $0x8] sm:$0xff]
    %v356 = vld [vmem:[%s8 + $0x10] sm:$0xff]
    %v357 = vld [vmem:[%s8 + $0x18] sm:$0xff]
    %v358 = vld [vmem:[%s8 + $0x20] sm:$0xff]
    %v359 = vld [vmem:[%s8 + $0x28] sm:$0xff]
    %v360 = vld [vmem:[%s8 + $0x30] sm:$0xff]
    %v361 = vld [vmem:[%s8 + $0x38] sm:$0xff]
    %v362 = vld [vmem:[%s8 + $0x40] sm:$0xff]
    %v363 = vld [vmem:[%s8 + $0x48] sm:$0xff]
    %v364 = vld [vmem:[%s8 + $0x50] sm:$0xff]
    %v365 = vld [vmem:[%s8 + $0x58] sm:$0xff]
    %v366 = vld [vmem:[%s8 + $0x60] sm:$0xff]
    %v367 = vld [vmem:[%s8 + $0x68] sm:$0xff]
    %v368 = vld [vmem:[%s8 + $0x70] sm:$0xff]
    %v369 = vld [vmem:[%s8 + $0x78] sm:$0xff]
    %v370 = vld [vmem:[%s8 + $0x80] sm:$0xff]
    %v371 = vld [vmem:[%s8 + $0x88] sm:$0xff]
    %v372 = vld [vmem:[%s8 + $0x90] sm:$0xff]
    %v373 = vld [vmem:[%s8 + $0x98] sm:$0xff]
    %v374 = vld [vmem:[%s8 + $0xa0] sm:$0xff]
    %v375 = vld [vmem:[%s8 + $0xa8] sm:$0xff]
    %v376 = vld [vmem:[%s8 + $0xb0] sm:$0xff]
    %v377 = vld [vmem:[%s8 + $0xb8] sm:$0xff]
    %v378 = vld [vmem:[%s8 + $0xc0] sm:$0xff]
    %v379 = vld [vmem:[%s8 + $0xc8] sm:$0xff]
    %v380 = vld [vmem:[%s8 + $0xd0] sm:$0xff]
    %v381 = vld [vmem:[%s8 + $0xd8] sm:$0xff]
    %v382 = vld [vmem:[%s8 + $0xe0] sm:$0xff]
    %v383 = vld [vmem:[%s8 + $0xe8] sm:$0xff]
    %v384 = vld [vmem:[%s8 + $0xf0] sm:$0xff]
    %v385 = vld [vmem:[%s8 + $0xf8] sm:$0xff]
    %386 = vmatprep.subr.mxu0 0.0
    %387 = vmatpush1.msra.mxu0 %v354
    %388 = vmatprep.subr.mxu0 0.0
    %389 = vmatpush1.msra.mxu0 %v355
    %390 = vmatprep.subr.mxu0 0.0
    %391 = vmatpush1.msra.mxu0 %v356
    %392 = vmatprep.subr.mxu0 0.0
    %393 = vmatpush1.msra.mxu0 %v357
    %394 = vmatprep.subr.mxu0 0.0
    %395 = vmatpush1.msra.mxu0 %v358
    %396 = vmatprep.subr.mxu0 0.0
    %397 = vmatpush1.msra.mxu0 %v359
    %398 = vmatprep.subr.mxu0 0.0
    %399 = vmatpush1.msra.mxu0 %v360
    %400 = vmatprep.subr.mxu0 0.0
    %401 = vmatpush1.msra.mxu0 %v361
    %402 = vmatprep.subr.mxu0 0.0
    %403 = vmatpush1.msra.mxu0 %v362
    %404 = vmatprep.subr.mxu0 0.0
    %405 = vmatpush1.msra.mxu0 %v363
    %406 = vmatprep.subr.mxu0 0.0
    %407 = vmatpush1.msra.mxu0 %v364
    %408 = vmatprep.subr.mxu0 0.0
    %409 = vmatpush1.msra.mxu0 %v365
    %410 = vmatprep.subr.mxu0 0.0
    %411 = vmatpush1.msra.mxu0 %v366
    %412 = vmatprep.subr.mxu0 0.0
    %413 = vmatpush1.msra.mxu0 %v367
    %414 = vmatprep.subr.mxu0 0.0
    %415 = vmatpush1.msra.mxu0 %v368
    %416 = vmatprep.subr.mxu0 0.0
    %417 = vmatpush1.msra.mxu0 %v369
    %418 = vmatprep.subr.mxu0 0.0
    %419 = vmatpush1.msra.mxu0 %v370
    %420 = vmatprep.subr.mxu0 0.0
    %421 = vmatpush1.msra.mxu0 %v371
    %422 = vmatprep.subr.mxu0 0.0
    %423 = vmatpush1.msra.mxu0 %v372
    %424 = vmatprep.subr.mxu0 0.0
    %425 = vmatpush1.msra.mxu0 %v373
    %426 = vmatprep.subr.mxu0 0.0
    %427 = vmatpush1.msra.mxu0 %v374
    %428 = vmatprep.subr.mxu0 0.0
    %429 = vmatpush1.msra.mxu0 %v375
    %430 = vmatprep.subr.mxu0 0.0
    %431 = vmatpush1.msra.mxu0 %v376
    %432 = vmatprep.subr.mxu0 0.0
    %433 = vmatpush1.msra.mxu0 %v377
    %434 = vmatprep.subr.mxu0 0.0
    %435 = vmatpush1.msra.mxu0 %v378
    %436 = vmatprep.subr.mxu0 0.0
    %437 = vmatpush1.msra.mxu0 %v379
    %438 = vmatprep.subr.mxu0 0.0
    %439 = vmatpush1.msra.mxu0 %v380
    %440 = vmatprep.subr.mxu0 0.0
    %441 = vmatpush1.msra.mxu0 %v381
    %442 = vmatprep.subr.mxu0 0.0
    %443 = vmatpush1.msra.mxu0 %v382
    %444 = vmatprep.subr.mxu0 0.0
    %445 = vmatpush1.msra.mxu0 %v383
    %446 = vmatprep.subr.mxu0 0.0
    %447 = vmatpush1.msra.mxu0 %v384
    %448 = vmatprep.subr.mxu0 0.0
    %449 = vmatpush1.msra.mxu0 %v385
    %450 = vmatprep.mubr.f32.mxu0 %v353
    %451 = vmatmul.mubr.f32.gmra.mrb[0].mxu0 %v351
    %v452 = vpop.f32.mrb[0].mxu0
    %v453 = vadd.f32 0.0, %v452
    %v454 = vpop.f32.mrb[0].mxu0
    %455 = vdwg.mxu0
    %vm456 = vcmask 130048
    %v458 = vsel %vm456, %v453, 0
    %v461 = vsel %vm456, %v354, 0
    %v464 = vsel %vm456, %v355, 0
    %v467 = vsel %vm456, %v356, 0
    %v470 = vsel %vm456, %v357, 0
    %v473 = vsel %vm456, %v358, 0
    %v476 = vsel %vm456, %v359, 0
    %v479 = vsel %vm456, %v360, 0
    %v482 = vsel %vm456, %v361, 0
    %v485 = vsel %vm456, %v362, 0
    %v488 = vsel %vm456, %v363, 0
    %v491 = vsel %vm456, %v364, 0
    %v494 = vsel %vm456, %v365, 0
    %v497 = vsel %vm456, %v366, 0
    %v500 = vsel %vm456, %v367, 0
    %v503 = vsel %vm456, %v368, 0
    %v506 = vsel %vm456, %v369, 0
    %v509 = vsel %vm456, %v370, 0
    %v512 = vsel %vm456, %v371, 0
    %v515 = vsel %vm456, %v372, 0
    %v518 = vsel %vm456, %v373, 0
    %v521 = vsel %vm456, %v374, 0
    %v524 = vsel %vm456, %v375, 0
    %v527 = vsel %vm456, %v376, 0
    %v530 = vsel %vm456, %v377, 0
    %v533 = vsel %vm456, %v378, 0
    %v536 = vsel %vm456, %v379, 0
    %v539 = vsel %vm456, %v380, 0
    %v542 = vsel %vm456, %v381, 0
    %v545 = vsel %vm456, %v382, 0
    %v548 = vsel %vm456, %v383, 0
    %v551 = vsel %vm456, %v384, 0
    %v554 = vsel %vm456, %v385, 0
    %556 = vmatprep.subr.mxu0 0.0
    %557 = vmatpush1.xpose.msra.mxu0 %v461
    %558 = vmatprep.subr.mxu0 0.0
    %559 = vmatpush1.xpose.msra.mxu0 %v464
    %560 = vmatprep.subr.mxu0 0.0
    %561 = vmatpush1.xpose.msra.mxu0 %v467
    %562 = vmatprep.subr.mxu0 0.0
    %563 = vmatpush1.xpose.msra.mxu0 %v470
    %564 = vmatprep.subr.mxu0 0.0
    %565 = vmatpush1.xpose.msra.mxu0 %v473
    %566 = vmatprep.subr.mxu0 0.0
    %567 = vmatpush1.xpose.msra.mxu0 %v476
    %568 = vmatprep.subr.mxu0 0.0
    %569 = vmatpush1.xpose.msra.mxu0 %v479
    %570 = vmatprep.subr.mxu0 0.0
    %571 = vmatpush1.xpose.msra.mxu0 %v482
    %572 = vmatprep.subr.mxu0 0.0
    %573 = vmatpush1.xpose.msra.mxu0 %v485
    %574 = vmatprep.subr.mxu0 0.0
    %575 = vmatpush1.xpose.msra.mxu0 %v488
    %576 = vmatprep.subr.mxu0 0.0
    %577 = vmatpush1.xpose.msra.mxu0 %v491
    %578 = vmatprep.subr.mxu0 0.0
    %579 = vmatpush1.xpose.msra.mxu0 %v494
    %580 = vmatprep.subr.mxu0 0.0
    %581 = vmatpush1.xpose.msra.mxu0 %v497
    %582 = vmatprep.subr.mxu0 0.0
    %583 = vmatpush1.xpose.msra.mxu0 %v500
    %584 = vmatprep.subr.mxu0 0.0
    %585 = vmatpush1.xpose.msra.mxu0 %v503
    %586 = vmatprep.subr.mxu0 0.0
    %587 = vmatpush1.xpose.msra.mxu0 %v506
    %588 = vmatprep.subr.mxu0 0.0
    %589 = vmatpush1.xpose.msra.mxu0 %v509
    %590 = vmatprep.subr.mxu0 0.0
    %591 = vmatpush1.xpose.msra.mxu0 %v512
    %592 = vmatprep.subr.mxu0 0.0
    %593 = vmatpush1.xpose.msra.mxu0 %v515
    %594 = vmatprep.subr.mxu0 0.0
    %595 = vmatpush1.xpose.msra.mxu0 %v518
    %596 = vmatprep.subr.mxu0 0.0
    %597 = vmatpush1.xpose.msra.mxu0 %v521
    %598 = vmatprep.subr.mxu0 0.0
    %599 = vmatpush1.xpose.msra.mxu0 %v524
    %600 = vmatprep.subr.mxu0 0.0
    %601 = vmatpush1.xpose.msra.mxu0 %v527
    %602 = vmatprep.subr.mxu0 0.0
    %603 = vmatpush1.xpose.msra.mxu0 %v530
    %604 = vmatprep.subr.mxu0 0.0
    %605 = vmatpush1.xpose.msra.mxu0 %v533
    %606 = vmatprep.subr.mxu0 0.0
    %607 = vmatpush1.xpose.msra.mxu0 %v536
    %608 = vmatprep.subr.mxu0 0.0
    %609 = vmatpush1.xpose.msra.mxu0 %v539
    %610 = vmatprep.subr.mxu0 0.0
    %611 = vmatpush1.xpose.msra.mxu0 %v542
    %612 = vmatprep.subr.mxu0 0.0
    %613 = vmatpush1.xpose.msra.mxu0 %v545
    %614 = vmatprep.subr.mxu0 0.0
    %615 = vmatpush1.xpose.msra.mxu0 %v548
    %616 = vmatprep.subr.mxu0 0.0
    %617 = vmatpush1.xpose.msra.mxu0 %v551
    %618 = vmatprep.subr.mxu0 0.0
    %619 = vmatpush1.xpose.msra.mxu0 %v554
    %620 = vmatprep.mubr.f32.mxu0 0.0
    %621 = vmatmul.mubr.f32.gmra.mrb[0].mxu0 %v458
    %v622 = vpop.f32.mrb[0].mxu0
    %v623 = vadd.f32 0.0, %v622
    %v624 = vpop.f32.mrb[0].mxu0
    %v625 = vadd.f32 0.0, %v624
    %626 = vdwg.mxu0
    %v627 = vrcp.pop %v623
    %v628 = vrcp.pop %v625
    %v629 = vmul.f32 %v351, %v627
    %v630 = vmul.f32 %v353, %v628
    %v633 = vcombine.low %v629, %v630
    %v635 = vunpack.c.l.s4 1983009808
    %v636 = vunpack.c.0.s8 %v635
    %v637 = vlaneseq
    %v638 = vshrl.u32 %v637, 7
    %v639 = vsub.s32 %v636, %v638
    %v640 = vrot.slane %v633, %v639
    %642 = vst [vmem:[#allocation4] sm:$0xf] %v640
    // Predicated region
    $region38: #{tpu_custom_call.1} parent=1 // pred_check
      _
    $region39: #{tpu_custom_call.1} parent=1 // pred_check_branch
      %644 = sbr.rel (0) target = $region41
    $region40: #{tpu_custom_call.1} parent=1 // pred_region
      %s646 = ssub.s32 64, 64
      %647 = vsyncadd [#allocation5], %s646
      %s649 = sshll.u32 [#allocation4], 4
      %s650 = int_to_ptr.vmem [resolvable:$true] %s649
      %652 = dma.vmem_to_hbm [thread:$0]  %s650, 64, %s9, [#allocation5]
    $region41: #{tpu_custom_call.1} parent=1 // pred_fallthru
      _
    // Predicated region
    $region42: #{tpu_custom_call.1} parent=1 // pred_check
      _
    $region43: #{tpu_custom_call.1} parent=1 // pred_check_branch
      %654 = sbr.rel (0) target = $region45
    $region44: #{tpu_custom_call.1} parent=1 // pred_region
      %655 = dma.done [#allocation5], 64
    $region45: #{tpu_custom_call.1} parent=1 // pred_fallthru
      _
    %656 = vsyncpa [#allocation5], 1

</llo_original>
